<compile_context>
chip_gen: v5e
topology: v5e:2x2
jax: 0.10.0
libtpu: 0.0.40
codegen_flags: <defaults>
</compile_context>

<pallas_src>
import functools

import numpy as np
import jax
import jax.numpy as jnp
from jax.experimental import pallas as pl
from jax.experimental.pallas import tpu as pltpu


PAD_LOGIT = -30.0          # softplus(-(-30)) rounds to exactly 30.0 in f32 -> BCE == 0
OBJ_BCE_BLOCK_ROWS = 1024  # (1024,128) f32 = 512 KiB per stream per grid step
CLS_BCE_BLOCK_ROWS = 256   # class stream is much smaller


def _bucket(n, minimum):
    """Round n up to a power of two, at least `minimum` (bounds Mosaic recompiles)."""
    n = max(int(n), 1)
    return max(int(minimum), 1 << (n - 1).bit_length())


# ----------------------------------------------------------------------------
# Pallas kernels
# ----------------------------------------------------------------------------

def _bce_block_sum_kernel(x_ref, t_ref, o_ref, *, pos_weight):
    """Per-block sum of BCEWithLogits(x, t) with pos_weight.  One (rows,128) tile
    per grid step, one (1,1) partial sum per step (grid axis is 'parallel')."""
    x = x_ref[...]
    t = t_ref[...]
    # stable softplus(-x) = log(1 + exp(-x))
    sp = jnp.maximum(-x, 0.0) + jnp.log1p(jnp.exp(-jnp.abs(x)))
    # BCEWithLogits with pos_weight pw: (1 - t) * x + (1 + (pw - 1) * t) * softplus(-x)
    loss = (1.0 - t) * x + (1.0 + (pos_weight - 1.0) * t) * sp
    o_ref[...] = jnp.sum(loss, keepdims=True)


def _weighted_bce(x2, t2, block_w, pos_weight, block_rows):
    """x2/t2: (nb*block_rows, 128) f32.  block_w: (nb,) per-block weights.
    Returns sum_b block_w[b] * sum(BCE over block b) as a device scalar."""
    rows = x2.shape[0]
    nb = rows // block_rows
    sums = pl.pallas_call(
        functools.partial(_bce_block_sum_kernel, pos_weight=float(pos_weight)),
        out_shape=jax.ShapeDtypeStruct((nb, 1), jnp.float32),
        grid=(nb,),
        in_specs=[pl.BlockSpec((block_rows, 128), lambda i: (i, 0)),
                  pl.BlockSpec((block_rows, 128), lambda i: (i, 0))],
        out_specs=pl.BlockSpec((1, 1), lambda i: (i, 0)),
        compiler_params=pltpu.CompilerParams(dimension_semantics=("parallel",)),
    )(x2, t2)
    return jnp.dot(sums[:, 0], block_w)


def _ota_cost_kernel(t_ref, p_ref, cls_ref, obj_ref, cid_ref, cost_ref, iou_ref,
                     *, eps, iou_weight):
    """Fused OTA cost.
    t_ref:   (Gp, 4)  gt boxes, xyxy
    p_ref:   (4, Pp)  pred boxes, xyxy (transposed)
    cls_ref: (C, Pp)  class logits (transposed)
    obj_ref: (1, Pp)  objectness logits
    cid_ref: (Gp, 1)  gt class ids (int32)
    cost_ref/iou_ref: (Gp, Pp)."""
    t = t_ref[...]
    p = p_ref[...]
    tx1, ty1, tx2, ty2 = t[:, 0:1], t[:, 1:2], t[:, 2:3], t[:, 3:4]   # (Gp,1)
    px1, py1, px2, py2 = p[0:1, :], p[1:2, :], p[2:3, :], p[3:4, :]   # (1,Pp)
    iw = jnp.maximum(jnp.minimum(tx2, px2) - jnp.maximum(tx1, px1), 0.0)
    ih = jnp.maximum(jnp.minimum(ty2, py2) - jnp.maximum(ty1, py1), 0.0)
    inter = iw * ih                                                    # (Gp,Pp)
    union = ((tx2 - tx1) * (ty2 - ty1) + (px2 - px1) * (py2 - py1)
             - inter + eps)                                            # +eps guard
    iou = inter / union
    iou_ref[...] = iou
    iou_loss = -jnp.log(iou + eps)

    # pairwise class cost:  sum_c BCE(z, onehot) = sum_c softplus(z) - z[cls_g]
    # with z = log(y/(1-y)), y = sqrt(sigmoid(cls)*sigmoid(obj)).
    # Use log-sigmoid identities: log_y = 0.5*(logsig(cls)+logsig(obj)),
    # softplus(z) = -log1p(-y), z = log_y - log1p(-y).  Clamp y < 1 (NaN guard).
    cl = cls_ref[...]                   # (C,Pp)
    ob = obj_ref[...]                   # (1,Pp)
    logsig_cls = -(jnp.maximum(-cl, 0.0) + jnp.log1p(jnp.exp(-jnp.abs(cl))))
    logsig_obj = -(jnp.maximum(-ob, 0.0) + jnp.log1p(jnp.exp(-jnp.abs(ob))))
    log_y = 0.5 * (logsig_cls + logsig_obj)            # (C,Pp)
    y = jnp.minimum(jnp.exp(log_y), 1.0 - 1e-7)
    log_1my = jnp.log1p(-y)
    z = log_y - log_1my                                 # logit of sqrt-score
    s_row = -jnp.sum(log_1my, axis=0, keepdims=True)    # (1,Pp) = sum_c softplus(z)

    cid = cid_ref[...]                                  # (Gp,1) int32
    num_gt = cid.shape[0]
    num_cls = cl.shape[0]
    onehot = (jax.lax.broadcasted_iota(jnp.int32, (num_gt, num_cls), 1) == cid)
    matched_z = jnp.dot(onehot.astype(jnp.float32), z,
                        preferred_element_type=jnp.float32)            # (Gp,Pp)
    cls_cost = s_row - matched_z
    cost_ref[...] = cls_cost + iou_weight * iou_loss


def _giou_kernel(p_ref, t_ref, o_ref, *, eps):
    """p_ref/t_ref: (4, N) boxes in xywh.  o_ref: (1, N) GIoU."""
    p = p_ref[...]
    t = t_ref[...]
    px, py, pw, ph = p[0:1, :], p[1:2, :], p[2:3, :], p[3:4, :]
    tx, ty, tw, th = t[0:1, :], t[1:2, :], t[2:3, :], t[3:4, :]
    b1x1, b1x2 = px - pw * 0.5, px + pw * 0.5
    b1y1, b1y2 = py - ph * 0.5, py + ph * 0.5
    b2x1, b2x2 = tx - tw * 0.5, tx + tw * 0.5
    b2y1, b2y2 = ty - th * 0.5, ty + th * 0.5
    inter = (jnp.maximum(jnp.minimum(b1x2, b2x2) - jnp.maximum(b1x1, b2x1), 0.0) *
             jnp.maximum(jnp.minimum(b1y2, b2y2) - jnp.maximum(b1y1, b2y1), 0.0))
    union = pw * ph + tw * th - inter + eps
    iou = inter / union
    cw = jnp.maximum(b1x2, b2x2) - jnp.minimum(b1x1, b2x1)
    ch = jnp.maximum(b1y2, b2y2) - jnp.minimum(b1y1, b2y1)
    c_area = cw * ch + eps
    o_ref[...] = iou - (c_area - union) / c_area


# ----------------------------------------------------------------------------
# Pallas wrappers (static-shape bucketing / padding)
# ----------------------------------------------------------------------------

def ota_cost_and_iou(t_xyxy, p_xyxy, p_cls, p_obj, gt_cls, num_classes,
                     eps, iou_weight):
    """Returns (cost[G,P], pair_iou[G,P]) as numpy, via one fused Pallas call."""
    G = int(t_xyxy.shape[0])
    P = int(p_xyxy.shape[0])
    Gp = _bucket(G, 8)
    Pp = _bucket(P, 128)
    t_pad = np.zeros((Gp, 4), np.float32)
    t_pad[:G] = np.asarray(t_xyxy, np.float32)
    p_pad = np.zeros((4, Pp), np.float32)
    p_pad[:, :P] = np.asarray(p_xyxy, np.float32).T
    c_pad = np.zeros((num_classes, Pp), np.float32)
    c_pad[:, :P] = np.asarray(p_cls, np.float32).T
    o_pad = np.zeros((1, Pp), np.float32)
    o_pad[0, :P] = np.asarray(p_obj, np.float32).reshape(-1)
    id_pad = np.zeros((Gp, 1), np.int32)
    id_pad[:G, 0] = np.asarray(gt_cls).astype(np.int32)
    cost, iou = pl.pallas_call(
        functools.partial(_ota_cost_kernel, eps=float(eps),
                          iou_weight=float(iou_weight)),
        out_shape=(jax.ShapeDtypeStruct((Gp, Pp), jnp.float32),
                   jax.ShapeDtypeStruct((Gp, Pp), jnp.float32)),
    )(jnp.asarray(t_pad), jnp.asarray(p_pad), jnp.asarray(c_pad),
      jnp.asarray(o_pad), jnp.asarray(id_pad))
    return np.asarray(cost)[:G, :P], np.asarray(iou)[:G, :P]


def box_iou_loss_giou(p_box_xywh, t_box_xywh, eps):
    """GIoU for matched (pred, target) xywh boxes.  Padded to a 128-lane bucket."""
    # TODO(synk): CIoU variant needs arctan; GIoU used as the IOU_LOSS_TYPE here.
    N = int(p_box_xywh.shape[0])
    Np = _bucket(N, 128)
    p_pad = np.zeros((4, Np), np.float32)
    t_pad = np.zeros((4, Np), np.float32)
    p_pad[2:4, :] = 1.0   # benign unit boxes in the padding (no 0/0)
    t_pad[2:4, :] = 1.0
    p_pad[:, :N] = np.asarray(p_box_xywh, np.float32).T
    t_pad[:, :N] = np.asarray(t_box_xywh, np.float32).T
    out = pl.pallas_call(
        functools.partial(_giou_kernel, eps=float(eps)),
        out_shape=jax.ShapeDtypeStruct((1, Np), jnp.float32),
    )(jnp.asarray(p_pad), jnp.asarray(t_pad))
    return np.asarray(out)[0, :N]


def batched_obj_bce(obj_logits_dev, t_object_nps, layer_weights, pos_weight):
    """All layers' objectness BCE in one Pallas call.
    obj_logits_dev: list of DEVICE (B,A,H,W) f32 arrays (never copied to host).
    t_object_nps:   list of numpy (B,A,H,W) targets (mostly zero).
    layer_weights:  balance[i] / N_i per layer (folds balance + mean)."""
    block_elems = OBJ_BCE_BLOCK_ROWS * 128
    xs, ts, ws = [], [], []
    for x_dev, t_np, w in zip(obj_logits_dev, t_object_nps, layer_weights):
        x_flat = x_dev.reshape(-1)
        n = int(x_flat.shape[0])
        nb = max(1, -(-n // block_elems))
        pad = nb * block_elems - n
        xs.append(x_flat)
        if pad:
            xs.append(jnp.full((pad,), PAD_LOGIT, jnp.float32))
        t_pad = np.zeros((nb * block_elems,), np.float32)
        t_pad[:n] = np.asarray(t_np, np.float32).reshape(-1)
        ts.append(t_pad)
        ws.extend([float(w)] * nb)
    x2 = jnp.concatenate(xs).reshape(-1, 128)
    t2 = jnp.asarray(np.concatenate(ts)).reshape(-1, 128)
    wv = jnp.asarray(np.asarray(ws, np.float32))
    return _weighted_bce(x2, t2, wv, pos_weight, OBJ_BCE_BLOCK_ROWS)


def batched_cls_bce(x_chunks, t_chunks, counts, pos_weight):
    """All layers' class BCE in one Pallas call (host-built, bucketed block count)."""
    block_elems = CLS_BCE_BLOCK_ROWS * 128
    xs, ts, ws = [], [], []
    for x_np, t_np, cnt in zip(x_chunks, t_chunks, counts):
        n = int(x_np.size)
        nb = max(1, -(-n // block_elems))
        x_pad = np.full((nb * block_elems,), PAD_LOGIT, np.float32)
        x_pad[:n] = np.asarray(x_np, np.float32).reshape(-1)
        t_pad = np.zeros((nb * block_elems,), np.float32)
        t_pad[:n] = np.asarray(t_np, np.float32).reshape(-1)
        xs.append(x_pad)
        ts.append(t_pad)
        ws.extend([1.0 / float(cnt)] * nb)
    nb_total = len(ws)
    nb_bucket = _bucket(nb_total, 1)          # bound distinct compiles
    extra = nb_bucket - nb_total
    if extra:
        xs.append(np.full((extra * block_elems,), PAD_LOGIT, np.float32))
        ts.append(np.zeros((extra * block_elems,), np.float32))
        ws.extend([0.0] * extra)
    x2 = jnp.asarray(np.concatenate(xs).reshape(-1, 128))
    t2 = jnp.asarray(np.concatenate(ts).reshape(-1, 128))
    wv = jnp.asarray(np.asarray(ws, np.float32))
    return _weighted_bce(x2, t2, wv, pos_weight, CLS_BCE_BLOCK_ROWS)


# ----------------------------------------------------------------------------
# NumPy glue (dynamic, data-dependent assignment logic)
# ----------------------------------------------------------------------------

def _sigmoid_np(x):
    return 1.0 / (1.0 + np.exp(-x))


def xywh2xyxy_np(x):
    y = np.copy(x)
    y[:, 0] = x[:, 0] - x[:, 2] / 2.0
    y[:, 1] = x[:, 1] - x[:, 3] / 2.0
    y[:, 2] = x[:, 0] + x[:, 2] / 2.0
    y[:, 3] = x[:, 1] + x[:, 3] / 2.0
    return y


class ComputeLossOTA:
    def __init__(self, loss_info, anchors, stride, num_classes):
        self.loss_info = loss_info
        self.num_layers = len(anchors)
        self.num_anchors = len(anchors[0]) // 2
        a = np.asarray(anchors, np.float32).reshape(self.num_layers, -1, 2)
        self.stride = np.asarray(stride, np.float32)
        self.num_classes = num_classes
        self.anchors = a / self.stride.reshape(-1, 1, 1)
        self.balance = loss_info['LOSS_BALANCE']

    # ------------------------------------------------------------------ glue
    def find_positive(self, output_np, targets_np):
        num_targets = targets_np.shape[0]
        indices, A = [], []
        gain = np.ones(7, dtype=np.float32)
        ai = np.tile(
            np.arange(self.num_anchors, dtype=np.float32).reshape(self.num_anchors, 1),
            (1, num_targets))
        t_all = np.concatenate(
            [np.tile(targets_np[None], (self.num_anchors, 1, 1)), ai[:, :, None]], axis=2)
        g = self.loss_info['GRID_BIAS']
        off = np.array([[0, 0], [1, 0], [0, 1], [-1, 0], [0, -1]], np.float32) * g
        for i in range(self.num_layers):
            anchors = self.anchors[i]
            shp = output_np[i].shape            # (B, na, H, W, no)
            gain[2:6] = np.array([shp[3], shp[2], shp[3], shp[2]], np.float32)
            t = t_all * gain
            r = t[:, :, 4:6] / anchors[:, None, :]
            j = np.maximum(r, 1.0 / r).max(axis=2) < self.loss_info['ANCHOR_T']
            t = t[j]
            gxy = t[:, 2:4]
            gxi = gain[[2, 3]] - gxy
            jm, km = ((gxy % 1.0 < g) & (gxy > 1.0)).T
            lm, mm = ((gxi % 1.0 < g) & (gxi > 1.0)).T
            jmask = np.stack([np.ones_like(jm), jm, km, lm, mm])
            t = np.tile(t[None], (5, 1, 1))[jmask]
            offsets = (np.zeros_like(gxy)[None] + off[:, None])[jmask]
            image_index = t[:, 0].astype(np.int64)
            gxy = t[:, 2:4]
            gij = np.trunc(gxy - offsets).astype(np.int64)
            gi, gj = gij[:, 0], gij[:, 1]
            anchor_index = t[:, 6].astype(np.int64)
            H, W = shp[2], shp[3]
            indices.append((image_index, anchor_index,
                            np.clip(gj, 0, H - 1), np.clip(gi, 0, W - 1)))
            A.append(anchors[anchor_index])
        return indices, A

    def build_targets(self, output_np, targets_np, image_shape):
        nl = self.num_layers
        indices, A = self.find_positive(output_np, targets_np)
        m_bi = [[] for _ in range(nl)]
        m_ai = [[] for _ in range(nl)]
        m_gj = [[] for _ in range(nl)]
        m_gi = [[] for _ in range(nl)]
        m_t = [[] for _ in range(nl)]
        m_a = [[] for _ in range(nl)]
        B = output_np[0].shape[0]
        eps = self.loss_info['AVOID_ZERO_EPS']
        for b in range(B):
            target = targets_np[targets_np[:, 0] == b]
            if target.shape[0] == 0:
                continue
            t_xywh = target[:, 2:6].copy()
            t_xywh[:, [0, 2]] *= image_shape[3]
            t_xywh[:, [1, 3]] *= image_shape[2]
            t_xyxy = xywh2xyxy_np(t_xywh)
            all_bi, all_ai, all_gj, all_gi, all_anch, from_layer = [], [], [], [], [], []
            p_obj_l, p_cls_l, p_xyxy_l = [], [], []
            for i in range(nl):
                bi, ai_, gj, gi = indices[i]
                sel = bi == b
                bi_, ai2, gj_, gi_ = bi[sel], ai_[sel], gj[sel], gi[sel]
                all_bi.append(bi_); all_ai.append(ai2)
                all_gj.append(gj_); all_gi.append(gi_)
                anch = A[i][sel]
                all_anch.append(anch)
                from_layer.append(np.full(bi_.shape[0], i, np.int64))
                fg = output_np[i][bi_, ai2, gj_, gi_]
                p_obj_l.append(fg[:, 4:5])
                p_cls_l.append(fg[:, 5:])
                grid = np.stack([gi_, gj_], axis=1).astype(np.float32)
                pxy = (_sigmoid_np(fg[:, :2]) * 2.0 - 0.5 + grid) * self.stride[i]
                pwh = (_sigmoid_np(fg[:, 2:4]) * 2.0) ** 2 * anch * self.stride[i]
                p_xyxy_l.append(xywh2xyxy_np(np.concatenate([pxy, pwh], axis=1)))
            p_xyxy = np.concatenate(p_xyxy_l, 0)
            if p_xyxy.shape[0] == 0:
                continue
            p_obj = np.concatenate(p_obj_l, 0)
            p_cls = np.concatenate(p_cls_l, 0)
            from_layer = np.concatenate(from_layer, 0)
            all_bi = np.concatenate(all_bi, 0)
            all_ai = np.concatenate(all_ai, 0)
            all_gj = np.concatenate(all_gj, 0)
            all_gi = np.concatenate(all_gi, 0)
            all_anch = np.concatenate(all_anch, 0)

            # --- Pallas: fused pairwise IoU + class cost + weighting (one call) ---
            cost, pair_iou = ota_cost_and_iou(
                t_xyxy, p_xyxy, p_cls, p_obj, target[:, 1], self.num_classes,
                eps, self.loss_info['COST_PAIRWISE_IOU_LOSS_WEIGHT'])

            k = min(self.loss_info['PAIRWISE_IOU_K'], pair_iou.shape[1])
            top_k = -np.sort(-pair_iou, axis=1)[:, :k]
            dynamic_k = np.maximum(top_k.sum(1).astype(np.int32), 1)

            # TODO(synk): dynamic-k OTA assignment (data-dependent top-k / masking)
            # has no static-shape Pallas equivalent; kept on host.
            num_gt = target.shape[0]
            matching_matrix = np.zeros_like(cost)
            for gt_i in range(num_gt):
                kk = int(dynamic_k[gt_i])
                pos = np.argsort(cost[gt_i], kind="stable")[:kk]
                matching_matrix[gt_i, pos] = 1.0
            anchor_matching_gt = matching_matrix.sum(0)
            multi = anchor_matching_gt > 1
            if multi.sum() > 0:
                cost_argmin = np.argmin(cost[:, multi], axis=0)
                matching_matrix[:, multi] = 0.0
                matching_matrix[cost_argmin, multi] = 1.0
            fg_mask = matching_matrix.sum(0) > 0.0
            matched_gt = np.argmax(matching_matrix[:, fg_mask], axis=0)
            from_layer = from_layer[fg_mask]
            all_bi = all_bi[fg_mask]; all_ai = all_ai[fg_mask]
            all_gj = all_gj[fg_mask]; all_gi = all_gi[fg_mask]
            all_anch = all_anch[fg_mask]
            target_m = target[matched_gt]
            for i in range(nl):
                li = from_layer == i
                m_bi[i].append(all_bi[li]); m_ai[i].append(all_ai[li])
                m_gj[i].append(all_gj[li]); m_gi[i].append(all_gi[li])
                m_t[i].append(target_m[li]); m_a[i].append(all_anch[li])
        for i in range(nl):
            if len(m_t[i]):
                m_bi[i] = np.concatenate(m_bi[i]); m_ai[i] = np.concatenate(m_ai[i])
                m_gj[i] = np.concatenate(m_gj[i]); m_gi[i] = np.concatenate(m_gi[i])
                m_t[i] = np.concatenate(m_t[i]); m_a[i] = np.concatenate(m_a[i])
            else:
                m_bi[i] = np.zeros((0,), np.int64); m_ai[i] = np.zeros((0,), np.int64)
                m_gj[i] = np.zeros((0,), np.int64); m_gi[i] = np.zeros((0,), np.int64)
                m_t[i] = np.zeros((0, 6), np.float32); m_a[i] = np.zeros((0, 2), np.float32)
        return m_bi, m_ai, m_gj, m_gi, m_t, m_a

    # --------------------------------------------------------------- forward
    def forward(self, output, targets, image):
        output_dev = [jnp.asarray(o, jnp.float32) for o in output]
        # TODO(synk): this full D2H copy feeds only the host-side dynamic-k OTA
        # glue (fg gathers / top-k); the objectness BCE hot path below uses the
        # device-resident arrays directly (no H2D re-upload of the grids).
        output_np = [np.asarray(o) for o in output_dev]
        targets_np = np.asarray(targets, np.float32)
        image_shape = tuple(int(s) for s in image.shape)
        m_bi, m_ai, m_gj, m_gi, m_t, m_a = self.build_targets(
            output_np, targets_np, image_shape)
        eps = self.loss_info['AVOID_ZERO_EPS']
        ratio = self.loss_info['IOU_LOSS_RATIO']
        loss_box = 0.0
        cls_x, cls_t, cls_cnt = [], [], []
        t_object_maps, layer_w = [], []
        for i, out_np in enumerate(output_np):
            bi, ai_, gj, gi = m_bi[i], m_ai[i], m_gj[i], m_gi[i]
            B, A_, H, W, _ = out_np.shape
            t_object = np.zeros((B, A_, H, W), np.float32)
            n = bi.shape[0]
            if n > 0:
                pred = out_np[bi, ai_, gj, gi]                       # (n, 5+C)
                grid = np.stack([gi, gj], axis=1).astype(np.float32)
                pxy = _sigmoid_np(pred[:, :2]) * 2.0 - 0.5
                pwh = (_sigmoid_np(pred[:, 2:4]) * 2.0) ** 2 * m_a[i]
                p_box = np.concatenate([pxy, pwh], axis=1)
                t_gain = np.array([W, H, W, H], np.float32)
                t_box = m_t[i][:, 2:6] * t_gain
                t_box[:, :2] -= grid
                # --- Pallas: GIoU box loss (padded to static bucket) ---
                iou = box_iou_loss_giou(p_box, t_box, eps)
                loss_box += float((1.0 - iou).mean())
                t_object[bi, ai_, gj, gi] = (1.0 - ratio) + ratio * np.clip(iou, 0.0, None)
                if self.num_classes > 1:
                    t_cls = np.zeros((n, self.num_classes), np.float32)
                    t_cls[np.arange(n), m_t[i][:, 1].astype(np.int64)] = 1.0
                    cls_x.append(pred[:, 5:])
                    cls_t.append(t_cls)
                    cls_cnt.append(n * self.num_classes)
            t_object_maps.append(t_object)
            layer_w.append(self.balance[i] / float(B * A_ * H * W))

        # --- Pallas: batched objectness BCE over all layer grids (hot path).
        # Big (1024,128) blocks, no mask stream, logits stay on device,
        # per-layer balance/mean folded into per-block weights.
        obj_logits = [output_dev[i][..., 4] for i in range(self.num_layers)]
        loss_obj = float(batched_obj_bce(
            obj_logits, t_object_maps, layer_w,
            self.loss_info['OBJECT_POSITIVE_WEIGHT']))

        loss_cls = 0.0
        if cls_x:
            # --- Pallas: batched class BCE across layers ---
            loss_cls = float(batched_cls_bce(
                cls_x, cls_t, cls_cnt, self.loss_info['CLASS_POSITIVE_WEIGHT']))

        nl = self.num_layers
        loss_box *= self.loss_info['BOX_GAIN'] * (3.0 / nl)
        loss_obj *= (self.loss_info['OBJECT_GAIN'] * (image_shape[2] / 640.0)
                     * (image_shape[3] / 640.0) * (3.0 / nl))
        loss_cls *= self.loss_info['CLASS_GAIN'] * (self.num_classes / 80.0) * (3.0 / nl)
        batch_size = image_shape[0]
        total = loss_box + loss_obj + loss_cls
        loss_items = jnp.asarray([loss_box, loss_obj, loss_cls, total], jnp.float32)
        return jnp.asarray(total * batch_size, jnp.float32), loss_items


# ----------------------------------------------------------------------------
# main
# ----------------------------------------------------------------------------

if __name__ == "__main__":
    key = jax.random.PRNGKey(0)
    num_classes = 4
    B = 2
    img_h = img_w = 64
    strides = [8.0, 16.0]
    anchors = [[10, 13, 16, 30, 33, 23],
               [30, 61, 62, 45, 59, 119]]
    loss_info = {
        'CLASS_POSITIVE_WEIGHT': 1.0,
        'OBJECT_POSITIVE_WEIGHT': 1.0,
        'LOSS_BALANCE': [4.0, 1.0],
        'IOU_LOSS_TYPE': 'GIoU',
        'AVOID_ZERO_EPS': 1e-7,
        'IOU_LOSS_RATIO': 1.0,
        'PAIRWISE_IOU_K': 10,
        'COST_PAIRWISE_IOU_LOSS_WEIGHT': 3.0,
        'GRID_BIAS': 0.5,
        'ANCHOR_T': 4.0,
        'BOX_GAIN': 0.05,
        'OBJECT_GAIN': 0.7,
        'CLASS_GAIN': 0.3,
    }
    na = 3
    no = 5 + num_classes

    keys = jax.random.split(key, 4)
    outputs = []
    for li, s in enumerate(strides):
        h, w = int(img_h // s), int(img_w // s)
        outputs.append(
            jax.random.normal(keys[li], (B, na, h, w, no), dtype=jnp.float32) * 0.5)
    image = jax.random.normal(keys[2], (B, 3, img_h, img_w), dtype=jnp.float32)
    # targets: [image_index, class, x, y, w, h] (normalized)
    targets = jnp.array([
        [0, 1, 0.50, 0.50, 0.30, 0.40],
        [0, 2, 0.25, 0.30, 0.20, 0.20],
        [1, 0, 0.70, 0.60, 0.40, 0.30],
        [1, 3, 0.40, 0.75, 0.15, 0.25],
    ], dtype=jnp.float32)

    loss_fn = ComputeLossOTA(loss_info, anchors, strides, num_classes)
    total_loss, loss_items = loss_fn.forward(outputs, targets, image)
    jax.block_until_ready((total_loss, loss_items))
    print("KERNEL_OK")
</pallas_src>

<mosaic_0001>
module attributes {stable_mosaic.version = 11 : i64} {
  func.func @_ota_cost_kernel(%arg0: memref<8x4xf32, #tpu.memory_space<vmem>>, %arg1: memref<4x128xf32, #tpu.memory_space<vmem>>, %arg2: memref<4x128xf32, #tpu.memory_space<vmem>>, %arg3: memref<1x128xf32, #tpu.memory_space<vmem>>, %arg4: memref<8x1xi32, #tpu.memory_space<vmem>>, %arg5: memref<8x128xf32, #tpu.memory_space<vmem>>, %arg6: memref<8x128xf32, #tpu.memory_space<vmem>>) attributes {dimension_semantics = [], scalar_prefetch = 0 : i64, scratch_operands = 0 : i64, tpu.core_type = #tpu.core_type<tc>} {
    %c0 = arith.constant 0 : index
    %c0_0 = arith.constant 0 : index
    %0 = vector.load %arg0[%c0, %c0_0] : memref<8x4xf32, #tpu.memory_space<vmem>>, vector<8x4xf32>
    %c0_1 = arith.constant 0 : index
    %c0_2 = arith.constant 0 : index
    %1 = vector.load %arg1[%c0_1, %c0_2] : memref<4x128xf32, #tpu.memory_space<vmem>>, vector<4x128xf32>
    %2 = vector.extract_strided_slice %0 {offsets = [0, 0], sizes = [8, 1], strides = [1, 1]} : vector<8x4xf32> to vector<8x1xf32>
    %3 = vector.extract_strided_slice %0 {offsets = [0, 1], sizes = [8, 1], strides = [1, 1]} : vector<8x4xf32> to vector<8x1xf32>
    %4 = vector.extract_strided_slice %0 {offsets = [0, 2], sizes = [8, 1], strides = [1, 1]} : vector<8x4xf32> to vector<8x1xf32>
    %5 = vector.extract_strided_slice %0 {offsets = [0, 3], sizes = [8, 1], strides = [1, 1]} : vector<8x4xf32> to vector<8x1xf32>
    %6 = vector.extract_strided_slice %1 {offsets = [0, 0], sizes = [1, 128], strides = [1, 1]} : vector<4x128xf32> to vector<1x128xf32>
    %7 = vector.extract_strided_slice %1 {offsets = [1, 0], sizes = [1, 128], strides = [1, 1]} : vector<4x128xf32> to vector<1x128xf32>
    %8 = vector.extract_strided_slice %1 {offsets = [2, 0], sizes = [1, 128], strides = [1, 1]} : vector<4x128xf32> to vector<1x128xf32>
    %9 = vector.extract_strided_slice %1 {offsets = [3, 0], sizes = [1, 128], strides = [1, 1]} : vector<4x128xf32> to vector<1x128xf32>
    %10 = vector.broadcast %4 : vector<8x1xf32> to vector<8x128xf32>
    %11 = vector.broadcast %8 : vector<1x128xf32> to vector<8x128xf32>
    %12 = arith.minimumf %10, %11 : vector<8x128xf32>
    %13 = vector.broadcast %2 : vector<8x1xf32> to vector<8x128xf32>
    %14 = vector.broadcast %6 : vector<1x128xf32> to vector<8x128xf32>
    %15 = arith.maximumf %13, %14 : vector<8x128xf32>
    %16 = arith.subf %12, %15 : vector<8x128xf32>
    %cst = arith.constant 0.000000e+00 : f32
    %17 = vector.broadcast %cst : f32 to vector<8x128xf32>
    %18 = arith.maximumf %16, %17 : vector<8x128xf32>
    %19 = vector.broadcast %5 : vector<8x1xf32> to vector<8x128xf32>
    %20 = vector.broadcast %9 : vector<1x128xf32> to vector<8x128xf32>
    %21 = arith.minimumf %19, %20 : vector<8x128xf32>
    %22 = vector.broadcast %3 : vector<8x1xf32> to vector<8x128xf32>
    %23 = vector.broadcast %7 : vector<1x128xf32> to vector<8x128xf32>
    %24 = arith.maximumf %22, %23 : vector<8x128xf32>
    %25 = arith.subf %21, %24 : vector<8x128xf32>
    %cst_3 = arith.constant 0.000000e+00 : f32
    %26 = vector.broadcast %cst_3 : f32 to vector<8x128xf32>
    %27 = arith.maximumf %25, %26 : vector<8x128xf32>
    %28 = arith.mulf %18, %27 : vector<8x128xf32>
    %29 = arith.subf %4, %2 : vector<8x1xf32>
    %30 = arith.subf %5, %3 : vector<8x1xf32>
    %31 = arith.mulf %29, %30 : vector<8x1xf32>
    %32 = arith.subf %8, %6 : vector<1x128xf32>
    %33 = arith.subf %9, %7 : vector<1x128xf32>
    %34 = arith.mulf %32, %33 : vector<1x128xf32>
    %35 = vector.broadcast %31 : vector<8x1xf32> to vector<8x128xf32>
    %36 = vector.broadcast %34 : vector<1x128xf32> to vector<8x128xf32>
    %37 = arith.addf %35, %36 : vector<8x128xf32>
    %38 = arith.subf %37, %28 : vector<8x128xf32>
    %cst_4 = arith.constant 1.000000e-07 : f32
    %39 = vector.broadcast %cst_4 : f32 to vector<8x128xf32>
    %40 = arith.addf %38, %39 : vector<8x128xf32>
    %41 = arith.divf %28, %40 : vector<8x128xf32>
    %c0_5 = arith.constant 0 : index
    %c0_6 = arith.constant 0 : index
    %42 = vector.load %arg6[%c0_5, %c0_6] : memref<8x128xf32, #tpu.memory_space<vmem>>, vector<8x128xf32>
    tpu.vector_store %arg6[%c0_5, %c0_6], %41 {strides = array<i32>} : memref<8x128xf32, #tpu.memory_space<vmem>>, vector<8x128xf32>,
    %cst_7 = arith.constant 1.000000e-07 : f32
    %43 = vector.broadcast %cst_7 : f32 to vector<8x128xf32>
    %44 = arith.addf %41, %43 : vector<8x128xf32>
    %45 = math.log %44 : vector<8x128xf32>
    %cst_8 = arith.constant 0.000000e+00 : f32
    %46 = vector.broadcast %cst_8 : f32 to vector<8x128xf32>
    %47 = arith.subf %46, %45 : vector<8x128xf32>
    %c0_9 = arith.constant 0 : index
    %c0_10 = arith.constant 0 : index
    %48 = vector.load %arg2[%c0_9, %c0_10] : memref<4x128xf32, #tpu.memory_space<vmem>>, vector<4x128xf32>
    %c0_11 = arith.constant 0 : index
    %c0_12 = arith.constant 0 : index
    %49 = vector.load %arg3[%c0_11, %c0_12] : memref<1x128xf32, #tpu.memory_space<vmem>>, vector<1x128xf32>
    %cst_13 = arith.constant 0.000000e+00 : f32
    %50 = vector.broadcast %cst_13 : f32 to vector<4x128xf32>
    %51 = arith.subf %50, %48 : vector<4x128xf32>
    %cst_14 = arith.constant 0.000000e+00 : f32
    %52 = vector.broadcast %cst_14 : f32 to vector<4x128xf32>
    %53 = arith.maximumf %51, %52 : vector<4x128xf32>
    %54 = math.absf %48 : vector<4x128xf32>
    %cst_15 = arith.constant 0.000000e+00 : f32
    %55 = vector.broadcast %cst_15 : f32 to vector<4x128xf32>
    %56 = arith.subf %55, %54 : vector<4x128xf32>
    %57 = math.exp %56 : vector<4x128xf32>
    %58 = math.log1p %57 : vector<4x128xf32>
    %59 = arith.addf %53, %58 : vector<4x128xf32>
    %cst_16 = arith.constant 0.000000e+00 : f32
    %60 = vector.broadcast %cst_16 : f32 to vector<4x128xf32>
    %61 = arith.subf %60, %59 : vector<4x128xf32>
    %cst_17 = arith.constant 0.000000e+00 : f32
    %62 = vector.broadcast %cst_17 : f32 to vector<1x128xf32>
    %63 = arith.subf %62, %49 : vector<1x128xf32>
    %cst_18 = arith.constant 0.000000e+00 : f32
    %64 = vector.broadcast %cst_18 : f32 to vector<1x128xf32>
    %65 = arith.maximumf %63, %64 : vector<1x128xf32>
    %66 = math.absf %49 : vector<1x128xf32>
    %cst_19 = arith.constant 0.000000e+00 : f32
    %67 = vector.broadcast %cst_19 : f32 to vector<1x128xf32>
    %68 = arith.subf %67, %66 : vector<1x128xf32>
    %69 = math.exp %68 : vector<1x128xf32>
    %70 = math.log1p %69 : vector<1x128xf32>
    %71 = arith.addf %65, %70 : vector<1x128xf32>
    %cst_20 = arith.constant 0.000000e+00 : f32
    %72 = vector.broadcast %cst_20 : f32 to vector<1x128xf32>
    %73 = arith.subf %72, %71 : vector<1x128xf32>
    %74 = vector.broadcast %73 : vector<1x128xf32> to vector<4x128xf32>
    %75 = arith.addf %61, %74 : vector<4x128xf32>
    %cst_21 = arith.constant 5.000000e-01 : f32
    %76 = vector.broadcast %cst_21 : f32 to vector<4x128xf32>
    %77 = arith.mulf %76, %75 : vector<4x128xf32>
    %78 = math.exp %77 : vector<4x128xf32>
    %cst_22 = arith.constant 0.99999988 : f32
    %79 = vector.broadcast %cst_22 : f32 to vector<4x128xf32>
    %80 = arith.minimumf %78, %79 : vector<4x128xf32>
    %cst_23 = arith.constant 0.000000e+00 : f32
    %81 = vector.broadcast %cst_23 : f32 to vector<4x128xf32>
    %82 = arith.subf %81, %80 : vector<4x128xf32>
    %83 = math.log1p %82 : vector<4x128xf32>
    %84 = arith.subf %77, %83 : vector<4x128xf32>
    %cst_24 = arith.constant dense<0.000000e+00> : vector<128xf32>
    %85 = vector.multi_reduction <add>, %83, %cst_24 [0] : vector<4x128xf32> to vector<128xf32>
    %86 = vector.shape_cast %85 : vector<128xf32> to vector<1x128xf32>
    %cst_25 = arith.constant 0.000000e+00 : f32
    %87 = vector.broadcast %cst_25 : f32 to vector<1x128xf32>
    %88 = arith.subf %87, %86 : vector<1x128xf32>
    %c0_26 = arith.constant 0 : index
    %c0_27 = arith.constant 0 : index
    %89 = vector.load %arg4[%c0_26, %c0_27] : memref<8x1xi32, #tpu.memory_space<vmem>>, vector<8x1xi32>
    %90 = tpu.iota {dimensions = array<i32: 1>} : vector<8x4xi32>
    %91 = vector.broadcast %89 : vector<8x1xi32> to vector<8x4xi32>
    %92 = arith.cmpi eq, %90, %91 : vector<8x4xi32>
    %93 = arith.extui %92 : vector<8x4xi1> to vector<8x4xi32>
    %94 = arith.sitofp %93 : vector<8x4xi32> to vector<8x4xf32>
    %cst_28 = arith.constant dense<0.000000e+00> : vector<8x128xf32>
    %95 = tpu.matmul %94, %84, %cst_28 {dimension_numbers = #tpu.dot_dimension_numbers<[1], [0], [0], [1], [0, 0, 1, 1], [], []>} : vector<8x4xf32>, vector<4x128xf32>, vector<8x128xf32> -> vector<8x128xf32>
    %96 = vector.broadcast %88 : vector<1x128xf32> to vector<8x128xf32>
    %97 = arith.subf %96, %95 : vector<8x128xf32>
    %cst_29 = arith.constant 3.000000e+00 : f32
    %98 = vector.broadcast %cst_29 : f32 to vector<8x128xf32>
    %99 = arith.mulf %98, %47 : vector<8x128xf32>
    %100 = arith.addf %97, %99 : vector<8x128xf32>
    %c0_30 = arith.constant 0 : index
    %c0_31 = arith.constant 0 : index
    %101 = vector.load %arg5[%c0_30, %c0_31] : memref<8x128xf32, #tpu.memory_space<vmem>>, vector<8x128xf32>
    tpu.vector_store %arg5[%c0_30, %c0_31], %100 {strides = array<i32>} : memref<8x128xf32, #tpu.memory_space<vmem>>, vector<8x128xf32>,
    return
  }
}

</mosaic_0001>

<llo_original>
// kernel: tpu_custom_call.1
$region0: #{tpu_custom_call.1}
  #allocation0 [shape = 'u32[]', space=smem, size = 0x4, offset = 0x4, fixed_abs, tag = 'smem constant byte address 0x4 - core index']
  #allocation1 [shape = 'u32[72,128]{1,0:T(1,128)}', space=vmem, size = 0x9000, scoped, tag = 'internal scratch']
  %s0 = inlined_call_operand.vmem [shape: f32[8,4], index: 0, kind: input, shape index: {}]
  %s1 = inlined_call_operand.vmem [shape: f32[4,128], index: 1, kind: input, shape index: {}]
  %s2 = inlined_call_operand.vmem [shape: f32[4,128], index: 2, kind: input, shape index: {}]
  %s3 = inlined_call_operand.vmem [shape: f32[1,128], index: 3, kind: input, shape index: {}]
  %s4 = inlined_call_operand.vmem [shape: s32[8,1], index: 4, kind: input, shape index: {}]
  %s5 = inlined_call_operand.hbm [shape: f32[8,128], index: 5, kind: output, shape index: {0}]
  %s6 = inlined_call_operand.hbm [shape: f32[8,128], index: 6, kind: output, shape index: {1}]
  %7 = xla_tuple %s5, %s6
  %s8 = sld [smem:[#allocation0]]
  $region38: #{tpu_custom_call.1} parent=0
    _
  %s10 = ssub.s32 1, %s8
  %s11 = scalar_select 0, %s10, %s8
  $region1: #{tpu_custom_call.1} parent=0
    #allocation2 [shape = 'u8[4096]{0}', space=vmem, size = 0x1000, scoped, tag = 'output window, operand 0, single buffered']
    #allocation3 [shape = 's32[1]{0}', space=sflag, size = 0x4, scoped, tag = 'scoped memory for tpu_custom_call.1']
    #allocation4 [shape = 'u8[4096]{0}', space=vmem, size = 0x1000, scoped, tag = 'output window, operand 1, single buffered']
    #allocation5 [shape = 's32[1]{0}', space=sflag, size = 0x4, scoped, tag = 'scoped memory for tpu_custom_call.1']
    %12 = vsyncpa [#allocation3], 0
    %13 = vsyncpa [#allocation5], 0
    // Predicated region
    $region2: #{tpu_custom_call.1} parent=1 // pred_check
      _
    $region3: #{tpu_custom_call.1} parent=1 // pred_check_branch
      %15 = sbr.rel (0) target = $region5
    $region4: #{tpu_custom_call.1} parent=1 // pred_region
      _
    $region5: #{tpu_custom_call.1} parent=1 // pred_fallthru
      _
    // Predicated region
    $region6: #{tpu_custom_call.1} parent=1 // pred_check
      _
    $region7: #{tpu_custom_call.1} parent=1 // pred_check_branch
      %17 = sbr.rel (0) target = $region9
    $region8: #{tpu_custom_call.1} parent=1 // pred_region
      _
    $region9: #{tpu_custom_call.1} parent=1 // pred_fallthru
      _
    // Predicated region
    $region10: #{tpu_custom_call.1} parent=1 // pred_check
      _
    $region11: #{tpu_custom_call.1} parent=1 // pred_check_branch
      %19 = sbr.rel (0) target = $region13
    $region12: #{tpu_custom_call.1} parent=1 // pred_region
      _
    $region13: #{tpu_custom_call.1} parent=1 // pred_fallthru
      _
    // Predicated region
    $region14: #{tpu_custom_call.1} parent=1 // pred_check
      _
    $region15: #{tpu_custom_call.1} parent=1 // pred_check_branch
      %21 = sbr.rel (0) target = $region17
    $region16: #{tpu_custom_call.1} parent=1 // pred_region
      _
    $region17: #{tpu_custom_call.1} parent=1 // pred_fallthru
      _
    // Predicated region
    $region18: #{tpu_custom_call.1} parent=1 // pred_check
      _
    $region19: #{tpu_custom_call.1} parent=1 // pred_check_branch
      %23 = sbr.rel (0) target = $region21
    $region20: #{tpu_custom_call.1} parent=1 // pred_region
      _
    $region21: #{tpu_custom_call.1} parent=1 // pred_fallthru
      _
    %v24 = vld [vmem:[%s0] sm:$0xff]
    %v25 = vld [vmem:[%s1] sm:$0xf]
    %27 = vset.pattern.permute.xlu0 2
    %28 = vperm.xlu0 %27, %v24
    %v29 = vpop.permute.xlu0 %28
    %v31 = vperm.slane %v25, 2
    %v32 = vmin.f32 %v29, %v31
    %33 = vset.pattern.permute.xlu0 0
    %34 = vperm.xlu0 %33, %v24
    %v35 = vpop.permute.xlu0 %34
    %v37 = vperm.slane %v25, 0
    %v38 = vmax.f32 %v35, %v37
    %v39 = vsub.f32 %v32, %v38
    %v40 = vmax.f32 %v39, 0.0
    %41 = vset.pattern.permute.xlu0 3
    %42 = vperm.xlu0 %41, %v24
    %v43 = vpop.permute.xlu0 %42
    %v45 = vperm.slane %v25, 3
    %v46 = vmin.f32 %v43, %v45
    %47 = vset.pattern.permute.xlu0 1
    %48 = vperm.xlu0 %47, %v24
    %v49 = vpop.permute.xlu0 %48
    %v51 = vperm.slane %v25, 1
    %v52 = vmax.f32 %v49, %v51
    %v53 = vsub.f32 %v46, %v52
    %v54 = vmax.f32 %v53, 0.0
    %v55 = vmul.f32 %v40, %v54
    %56 = vrot.lane.b32.xlu0 %v24, 2
    %v57 = vpop.permute.xlu0 %56
    %v59 = vsub.f32 %v24, %v57
    %61 = vrot.lane.b32.xlu0 %v59, 127
    %v62 = vpop.permute.xlu0 %61
    %v64 = vmul.f32 %v59, %v62
    %v66 = vrot.slane %v25, 6
    %v68 = vsub.f32 %v25, %v66
    %v70 = vrot.slane %v68, 1
    %v72 = vmul.f32 %v68, %v70
    %74 = vset.pattern.permute.xlu0 2
    %75 = vperm.xlu0 %74, %v64
    %v76 = vpop.permute.xlu0 %75
    %v78 = vperm.slane %v72, 2
    %v79 = vadd.f32 %v76, %v78
    %v80 = vsub.f32 %v79, %v55
    %v81 = vadd.f32 %v80, 1e-07
    %v82 = vrcp.pop %v81
    %v83 = vmul.f32 %v81, %v82
    %v84 = vsub.f32 1.0, %v83
    %v85 = vmul.f32 %v82, %v84
    %v86 = vadd.f32 %v82, %v85
    %vm87 = vweird.f32 %v81
    %vm88 = vweird.f32 %v82
    %vm89 = vmor %vm87, %vm88
    %v90 = vsel %vm89, %v82, %v86
    %v91 = vand.u32 2147483647, %v81
    %vm92 = vcmp.eq.f32.partialorder %v91, 8.507059e+37
    %v93 = vand.u32 %v81, 2147483648
    %v94 = vor.u32 1.1754944e-38, %v93
    %v95 = vsel %vm92, %v94, %v90
    %v96 = vmul.f32 %v55, %v95
    %97 = vst [vmem:[#allocation4] sm:$0xff] %v96
    %v98 = vadd.f32 %v96, 1e-07
    %v99 = vlog2.pop %v98
    %v100 = vmul.f32 %v99, 0.6931472
    %v101 = vsub.f32 0.0, %v100
    %v102 = vld [vmem:[%s2] sm:$0xf]
    %v103 = vld [vmem:[%s3] sm:$0x1]
    %v104 = vsub.f32 0.0, %v102
    %v105 = vmax.f32 %v104, 0.0
    %v106 = vand.u32 2147483647, %v102
    %v107 = vsub.f32 0.0, %v106
    %v108 = vmul.f32 %v107, 1.442695
    %v109 = vpow.pop %v108
    %v110 = vadd.f32 %v109, 1.0
    %v111 = vlog2.pop %v110
    %v112 = vmul.f32 %v111, 0.6931472
    %v113 = vmul.f32 -0.5, %v109
    %v114 = vadd.f32 %v113, 1.0
    %v115 = vmul.f32 %v114, %v109
    %v116 = vand.u32 2147483647, %v109
    %vm117 = vcmp.lt.f32.partialorder %v116, 0.0004427343
    %v118 = vsel %vm117, %v115, %v112
    %v119 = vadd.f32 %v105, %v118
    %v120 = vsub.f32 0.0, %v119
    %v121 = vsub.f32 0.0, %v103
    %v122 = vmax.f32 %v121, 0.0
    %v123 = vand.u32 2147483647, %v103
    %v124 = vsub.f32 0.0, %v123
    %v125 = vmul.f32 %v124, 1.442695
    %v126 = vpow.pop %v125
    %v127 = vadd.f32 %v126, 1.0
    %v128 = vlog2.pop %v127
    %v129 = vmul.f32 %v128, 0.6931472
    %v130 = vmul.f32 -0.5, %v126
    %v131 = vadd.f32 %v130, 1.0
    %v132 = vmul.f32 %v131, %v126
    %v133 = vand.u32 2147483647, %v126
    %vm134 = vcmp.lt.f32.partialorder %v133, 0.0004427343
    %v135 = vsel %vm134, %v132, %v129
    %v136 = vadd.f32 %v122, %v135
    %v137 = vsub.f32 0.0, %v136
    %v139 = vperm.slane %v137, 0
    %v141 = vadd.f32 %v120, %v139
    %v142 = vmul.f32 %v141, 0.5
    %v143 = vmul.f32 %v142, 1.442695
    %v144 = vpow.pop %v143
    %v145 = vmin.f32 %v144, 0.9999999
    %v146 = vsub.f32 0.0, %v145
    %v147 = vadd.f32 %v146, 1.0
    %v148 = vlog2.pop %v147
    %v149 = vmul.f32 %v148, 0.6931472
    %v150 = vmul.f32 -0.5, %v146
    %v151 = vadd.f32 %v150, 1.0
    %v152 = vmul.f32 %v151, %v146
    %v153 = vand.u32 2147483647, %v146
    %vm154 = vcmp.lt.f32.partialorder %v153, 0.0004427343
    %v155 = vsel %vm154, %v152, %v149
    %v156 = vsub.f32 %v142, %v155
    %vm157 = vcmask 1043456
    %v158 = vsel %vm157, %v155, 0.0
    %v159 = vrot.slane %v158, 4
    %v160 = vadd.f32 %v158, %v159
    %v161 = vrot.slane %v160, 2
    %v162 = vadd.f32 %v160, %v161
    %v163 = vrot.slane %v162, 1
    %v164 = vadd.f32 %v162, %v163
    %v165 = vsub.f32 0.0, %v164
    %v166 = vld [vmem:[%s4] sm:$0xff]
    %v167 = vlaneseq
    %v168 = vand.u32 %v167, 127
    %169 = vset.pattern.permute.xlu0 0
    %170 = vperm.xlu0 %169, %v166
    %v171 = vpop.permute.xlu0 %170
    %vm172 = vcmp.eq.s32.totalorder %v168, %v171
    %v173 = vsel %vm172, 1, 0
    %v174 = vcvt.s32.f32 %v173
    %vm175 = vcmask 31744
    %v177 = vsel %vm175, %v174, 0
    %v180 = vsel %vm157, %v156, 0
    %182 = vmatpush.msra.mxu0 0.0
    %183 = vmatpush.msra.mxu0 0.0
    %184 = vmatpush.msra.mxu0 0.0
    %185 = vmatpush.msra.mxu0 0.0
    %186 = vmatpush.msra.mxu0 0.0
    %187 = vmatpush.msra.mxu0 0.0
    %188 = vmatpush.msra.mxu0 0.0
    %189 = vmatpush.msra.mxu0 0.0
    %190 = vmatpush.msra.mxu0 0.0
    %191 = vmatpush.msra.mxu0 0.0
    %192 = vmatpush.msra.mxu0 0.0
    %193 = vmatpush.msra.mxu0 0.0
    %194 = vmatpush.msra.mxu0 0.0
    %195 = vmatpush.msra.mxu0 0.0
    %196 = vmatpush.msra.mxu0 0.0
    %197 = vmatpush.msra.mxu0 %v180
    %198 = vmatmul.f32.gmra.mxu0 %v177
    %v199 = vpop.f32.mrf.mxu0
    %v200 = vadd.f32 0.0, %v199
    %201 = vdwg.mxu0
    %v202 = vsub.f32 %v165, %v200
    %v203 = vmul.f32 %v101, 3.0
    %v204 = vadd.f32 %v202, %v203
    %205 = vst [vmem:[#allocation2] sm:$0xff] %v204
    // Predicated region
    $region22: #{tpu_custom_call.1} parent=1 // pred_check
      _
    $region23: #{tpu_custom_call.1} parent=1 // pred_check_branch
      %207 = sbr.rel (0) target = $region25
    $region24: #{tpu_custom_call.1} parent=1 // pred_region
      %209 = vsyncadd [#allocation3], 0
      %s211 = sshll.u32 [#allocation2], 4
      %s212 = int_to_ptr.vmem [resolvable:$true] %s211
      %s213 = sshll.u32 %s5, 4
      %s214 = int_to_ptr.hbm [resolvable:$true] %s213
      %216 = dma.vmem_to_hbm [thread:$0]  %s212, 128, %s214, [#allocation3]
    $region25: #{tpu_custom_call.1} parent=1 // pred_fallthru
      _
    // Predicated region
    $region26: #{tpu_custom_call.1} parent=1 // pred_check
      _
    $region27: #{tpu_custom_call.1} parent=1 // pred_check_branch
      %218 = sbr.rel (0) target = $region29
    $region28: #{tpu_custom_call.1} parent=1 // pred_region
      %220 = vsyncadd [#allocation5], 0
      %s222 = sshll.u32 [#allocation4], 4
      %s223 = int_to_ptr.vmem [resolvable:$true] %s222
      %s224 = sshll.u32 %s6, 4
      %s225 = int_to_ptr.hbm [resolvable:$true] %s224
      %227 = dma.vmem_to_hbm [thread:$0]  %s223, 128, %s225, [#allocation5]
    $region29: #{tpu_custom_call.1} parent=1 // pred_fallthru
      _
    // Predicated region
    $region30: #{tpu_custom_call.1} parent=1 // pred_check
      _
    $region31: #{tpu_custom_call.1} parent=1 // pred_check_branch
      %229 = sbr.rel (0) target = $region33
    $region32: #{tpu_custom_call.1} parent=1 // pred_region
      %231 = dma.done [#allocation3], 128
    $region33: #{tpu_custom_call.1} parent=1 // pred_fallthru
      _
    // Predicated region
    $region34: #{tpu_custom_call.1} parent=1 // pred_check
      _
    $region35: #{tpu_custom_call.1} parent=1 // pred_check_branch
      %233 = sbr.rel (0) target = $region37
    $region36: #{tpu_custom_call.1} parent=1 // pred_region
      %235 = dma.done [#allocation5], 128
    $region37: #{tpu_custom_call.1} parent=1 // pred_fallthru
      _
    %236 = vsyncpa [#allocation3], 1
    %237 = vsyncpa [#allocation5], 1

</llo_original>
